<compile_context>
chip_gen: v7x
topology: tpu7x:2x2x1
jax: 0.10.0
libtpu: 0.0.40
codegen_flags: <defaults>
</compile_context>

<pallas_src>
import functools

import jax
import jax.numpy as jnp
from jax import lax
from jax.experimental import pallas as pl
from jax.experimental.pallas import tpu as pltpu

_EPS = 1e-5


def _round_up(x, m):
    return (x + m - 1) // m * m


def _vmem_capacity_bytes():
    """Physical VMEM of the current TPU generation (conservative fallback)."""
    try:
        cap = getattr(pltpu.get_tpu_info(), "vmem_capacity_bytes", None)
        if cap:
            return int(cap)
    except Exception:
        pass
    return 64 << 20  # v7x per-TensorCore VMEM; safe lower bound everywhere.


def _num_tensorcores():
    """Best-effort TensorCore count per chip (used only for grid splitting)."""
    try:
        info = pltpu.get_tpu_info()
        for name in ("num_tensorcores", "tensorcore_count", "num_cores",
                     "cores_per_chip", "num_cores_per_chip"):
            v = getattr(info, name, None)
            if isinstance(v, int) and 1 <= v <= 8:
                return v
    except Exception:
        pass
    # Heuristic: 64 MiB-per-core VMEM parts (v7x-class) carry 2 TensorCores.
    return 2 if _vmem_capacity_bytes() <= (64 << 20) else 1


def _vmem_plan():
    """(vmem_limit_bytes, usable budget, per-input block byte target)."""
    cap = _vmem_capacity_bytes()
    if cap <= (64 << 20):          # v7x-class: 64 MiB per TensorCore.
        vmem_limit = 56 << 20
        target_block_bytes = 3 << 20
    else:                          # v5e / v6e: 128 MiB.
        vmem_limit = min(cap * 3 // 4, 96 << 20)
        target_block_bytes = 6 << 20
    budget = int(vmem_limit * 0.8)
    return vmem_limit, budget, target_block_bytes


# ----------------------------------------------------------------------------
# Fused single-pass kernel: one block spans the whole H*W axis.
# ----------------------------------------------------------------------------
def _adain_fused_kernel(x_ref, s_ref, o_ref):
    hw = x_ref.shape[-1]
    x = x_ref[...].astype(jnp.float32)

    # Content (InstanceNorm2d) stats: two-pass mean / biased variance.  The
    # centered tile only feeds the variance reduction; the output below is a
    # plain FMA on x so nothing centered has to stay live.
    x_mean = jnp.mean(x, axis=-1, keepdims=True)
    x_var = jnp.mean(jnp.square(x - x_mean), axis=-1, keepdims=True)

    # Style stats from f32 sum / sum-of-squares of the native-dtype tile so no
    # second full f32 copy has to persist (style data never reaches the output).
    s = s_ref[...]
    s_sum = jnp.sum(s.astype(jnp.float32), axis=-1, keepdims=True)
    s_sumsq = jnp.sum(jnp.square(s.astype(jnp.float32)), axis=-1, keepdims=True)
    s_mean = s_sum * (1.0 / hw)
    s_var = jnp.maximum(s_sumsq - s_sum * s_mean, 0.0) / (hw - 1)  # unbiased

    # Single FMA pass over the big tile: out = x * scale + shift.
    scale = jnp.sqrt(s_var + _EPS) * lax.rsqrt(x_var + _EPS)
    shift = s_mean - x_mean * scale
    o_ref[...] = (x * scale + shift).astype(o_ref.dtype)


# ----------------------------------------------------------------------------
# Split path for large H*W: streaming stats pre-pass (per-chunk centered sums,
# Chan-style combine -> per-row scale/shift) followed by a tiled FMA apply.
# ----------------------------------------------------------------------------
def _stats_kernel(x_ref, s_ref, scale_ref, shift_ref,
                  xm_acc, xm2_acc, sm_acc, sm2_acc, *, hw):
    k = pl.program_id(1)
    bc = x_ref.shape[-1]

    @pl.when(k == 0)
    def _():
        xm_acc[...] = jnp.zeros_like(xm_acc)
        xm2_acc[...] = jnp.zeros_like(xm2_acc)
        sm_acc[...] = jnp.zeros_like(sm_acc)
        sm2_acc[...] = jnp.zeros_like(sm2_acc)

    # Column mask for the (possibly partial) last chunk; no HBM padding needed.
    col0 = k * bc
    col = col0 + lax.broadcasted_iota(jnp.int32, x_ref.shape, 1)
    mask = col < hw
    n_prev = jnp.minimum(col0, hw).astype(jnp.float32)
    n_c = (jnp.minimum(col0 + bc, hw) - col0).astype(jnp.float32)
    n_new = n_prev + n_c

    def update(ref, mean_acc, m2_acc):
        v = jnp.where(mask, ref[...].astype(jnp.float32), 0.0)
        mean_c = jnp.sum(v, axis=-1, keepdims=True) / n_c
        d = jnp.where(mask, v - mean_c, 0.0)
        m2_c = jnp.sum(d * d, axis=-1, keepdims=True)
        delta = mean_c - mean_acc[...]
        mean_acc[...] = mean_acc[...] + delta * (n_c / n_new)
        m2_acc[...] = m2_acc[...] + m2_c + delta * delta * (n_prev * n_c / n_new)

    update(x_ref, xm_acc, xm2_acc)
    update(s_ref, sm_acc, sm2_acc)

    @pl.when(k == pl.num_programs(1) - 1)
    def _():
        hw_f = float(hw)
        x_var = xm2_acc[...] / hw_f                 # biased (InstanceNorm2d)
        s_var = sm2_acc[...] / (hw_f - 1.0)         # unbiased (torch .var)
        scale = jnp.sqrt(s_var + _EPS) * lax.rsqrt(x_var + _EPS)
        scale_ref[...] = scale
        shift_ref[...] = sm_acc[...] - xm_acc[...] * scale


def _apply_kernel(scale_ref, shift_ref, x_ref, o_ref):
    x = x_ref[...].astype(jnp.float32)
    o_ref[...] = (x * scale_ref[...] + shift_ref[...]).astype(o_ref.dtype)


# ----------------------------------------------------------------------------
# Wrapper
# ----------------------------------------------------------------------------
def adaptive_instance_norm(content, style, *, block_rows=None, block_cols=None,
                           force_split=None):
    """content, style: (N, C, H, W) arrays of the same dtype/shape."""
    assert content.shape == style.shape and content.ndim == 4
    N, C, H, W = content.shape
    rows, hw = N * C, H * W
    assert hw >= 2, "unbiased style variance needs H*W >= 2"

    dtype = content.dtype
    dtype_bytes = jnp.dtype(dtype).itemsize
    row_align = 16 if dtype_bytes == 2 else 8   # bf16 packs 16 sublanes/vreg

    vmem_limit, budget, target_block_bytes = _vmem_plan()
    num_tc = _num_tensorcores()

    # Per-row VMEM cost of a full-hw fused block: 3 I/O arrays x 2 pipeline
    # buffers (native dtype) + ~3 live f32 tiles in the (slimmed) kernel body.
    per_row_fused = hw * (6 * dtype_bytes + 3 * 4)
    fits_fused = min(rows, row_align) * per_row_fused <= budget
    use_split = (not fits_fused) if force_split is None else force_split

    x2d = content.reshape(rows, hw)
    s2d = style.reshape(rows, hw)

    def legal_block_rows(br):
        # Block sublane dim must be a multiple of the alignment (partial last
        # blocks are fine) or equal to the full row extent.
        if rows < row_align:
            return rows
        return max(row_align, min(br, (rows // row_align) * row_align))

    if not use_split:
        # ----- single-pass kernel; block spans the full hw axis -----
        if block_rows is None:
            target = max(row_align,
                         (target_block_bytes // max(1, hw * dtype_bytes))
                         // row_align * row_align)
            vmem_rows = max(row_align,
                            (budget // per_row_fused) // row_align * row_align)
            block_rows = min(target, vmem_rows)
            # Only split the grid for megacore chips, and aim for >= 2 steps
            # per TensorCore so each core can double-buffer its DMAs.
            if num_tc >= 2:
                min_steps = 2 * num_tc
                if rows >= min_steps * row_align:
                    block_rows = min(
                        block_rows,
                        max(row_align, (rows // min_steps) // row_align * row_align))
        block_rows = legal_block_rows(block_rows)
        grid_rows = pl.cdiv(rows, block_rows)   # no padding; tail block partial

        out2d = pl.pallas_call(
            _adain_fused_kernel,
            out_shape=jax.ShapeDtypeStruct((rows, hw), dtype),
            grid_spec=pltpu.PrefetchScalarGridSpec(
                num_scalar_prefetch=0,
                grid=(grid_rows,),
                in_specs=[
                    pl.BlockSpec((block_rows, hw), lambda i: (i, 0)),
                    pl.BlockSpec((block_rows, hw), lambda i: (i, 0)),
                ],
                out_specs=pl.BlockSpec((block_rows, hw), lambda i: (i, 0)),
            ),
            compiler_params=pltpu.CompilerParams(
                dimension_semantics=("parallel",),
                vmem_limit_bytes=vmem_limit,
            ),
        )(x2d, s2d)
        return out2d.reshape(N, C, H, W)

    # ----- split path: streaming stats pre-pass + tiled apply (no padding) ---
    if block_rows is None:
        block_rows = row_align
    block_rows = legal_block_rows(block_rows)
    grid_rows = pl.cdiv(rows, block_rows)

    if block_cols is None:
        # Largest lane-aligned chunk within the byte budget, then balance the
        # chunks so the last (masked) one is nearly full.
        max_cols = max(128,
                       (target_block_bytes // max(1, block_rows * dtype_bytes))
                       // 128 * 128)
        n_chunks = pl.cdiv(hw, max_cols)
        block_cols = _round_up(pl.cdiv(hw, n_chunks), 128)
    if hw < 128:
        block_cols = hw
    else:
        block_cols = max(128, min(block_cols, (hw // 128) * 128))
    grid_cols = pl.cdiv(hw, block_cols)

    stat_shape = jax.ShapeDtypeStruct((rows, 1), jnp.float32)
    stat_spec = pl.BlockSpec((block_rows, 1), lambda i, k: (i, 0))

    scale, shift = pl.pallas_call(
        functools.partial(_stats_kernel, hw=hw),
        out_shape=(stat_shape, stat_shape),
        grid_spec=pltpu.PrefetchScalarGridSpec(
            num_scalar_prefetch=0,
            grid=(grid_rows, grid_cols),
            in_specs=[
                pl.BlockSpec((block_rows, block_cols), lambda i, k: (i, k)),
                pl.BlockSpec((block_rows, block_cols), lambda i, k: (i, k)),
            ],
            out_specs=(stat_spec, stat_spec),
            scratch_shapes=[pltpu.VMEM((block_rows, 1), jnp.float32)] * 4,
        ),
        compiler_params=pltpu.CompilerParams(
            dimension_semantics=("parallel", "arbitrary"),
            vmem_limit_bytes=vmem_limit,
        ),
    )(x2d, s2d)

    out2d = pl.pallas_call(
        _apply_kernel,
        out_shape=jax.ShapeDtypeStruct((rows, hw), dtype),
        grid_spec=pltpu.PrefetchScalarGridSpec(
            num_scalar_prefetch=0,
            grid=(grid_rows, grid_cols),
            in_specs=[stat_spec, stat_spec,
                      pl.BlockSpec((block_rows, block_cols),
                                   lambda i, k: (i, k))],
            out_specs=pl.BlockSpec((block_rows, block_cols),
                                   lambda i, k: (i, k)),
        ),
        compiler_params=pltpu.CompilerParams(
            dimension_semantics=("parallel", "parallel"),
            vmem_limit_bytes=vmem_limit,
        ),
    )(scale, shift, x2d)
    return out2d.reshape(N, C, H, W)


# ----------------------------------------------------------------------------
# Pure-JAX reference mirroring the PyTorch math (sanity check).
# ----------------------------------------------------------------------------
def _reference(content, style):
    N, C, H, W = content.shape
    hw = H * W
    x = content.reshape(N, C, hw).astype(jnp.float32)
    s = style.reshape(N, C, hw).astype(jnp.float32)

    x_mean = x.mean(axis=2, keepdims=True)
    x_var = ((x - x_mean) ** 2).mean(axis=2, keepdims=True)
    x_norm = (x - x_mean) / jnp.sqrt(x_var + _EPS)

    s_mean = s.mean(axis=2, keepdims=True)
    s_var = ((s - s_mean) ** 2).sum(axis=2, keepdims=True) / (hw - 1)
    s_std = jnp.sqrt(s_var + _EPS)

    return (s_std * x_norm + s_mean).reshape(N, C, H, W).astype(content.dtype)


if __name__ == "__main__":
    key = jax.random.PRNGKey(0)
    k1, k2, k3, k4, k5, k6 = jax.random.split(key, 6)

    # Main case from the module spec: in_features = C = 4.
    N, C, H, W = 2, 4, 16, 16
    content = jax.random.normal(k1, (N, C, H, W), dtype=jnp.float32)
    style = 2.0 * jax.random.normal(k2, (N, C, H, W), dtype=jnp.float32) + 0.5

    out = jax.block_until_ready(adaptive_instance_norm(content, style))
    ref = _reference(content, style)
    assert out.shape == (N, C, H, W)
    assert jnp.allclose(out, ref, atol=1e-3, rtol=1e-3)

    # Fused path with a partial (unpadded) last row block: rows = 12, grid = 2.
    c3 = jax.random.normal(k5, (3, 4, 8, 16), dtype=jnp.float32) + 1.0
    s3 = 0.7 * jax.random.normal(k6, (3, 4, 8, 16), dtype=jnp.float32) - 0.3
    out3 = jax.block_until_ready(adaptive_instance_norm(c3, s3))
    ref3 = _reference(c3, s3)
    assert out3.shape == c3.shape
    assert jnp.allclose(out3, ref3, atol=1e-3, rtol=1e-3)

    # Exercise the large-H*W split path (stats pre-pass + apply) at small size.
    N2, C2, H2, W2 = 2, 3, 16, 64
    c2 = jax.random.normal(k3, (N2, C2, H2, W2), dtype=jnp.float32)
    s2 = 1.5 * jax.random.normal(k4, (N2, C2, H2, W2), dtype=jnp.float32) - 0.25
    out2 = jax.block_until_ready(
        adaptive_instance_norm(c2, s2, force_split=True, block_cols=256))
    ref2 = _reference(c2, s2)
    assert out2.shape == (N2, C2, H2, W2)
    assert jnp.allclose(out2, ref2, atol=1e-3, rtol=1e-3)

    print("KERNEL_OK")
</pallas_src>

<mosaic_0001>
module attributes {stable_mosaic.version = 11 : i64} {
  func.func @_adain_fused_kernel(%arg0: i32, %arg1: memref<8x256xf32, #tpu.memory_space<vmem>>, %arg2: memref<8x256xf32, #tpu.memory_space<vmem>>, %arg3: memref<8x256xf32, #tpu.memory_space<vmem>>) attributes {dimension_semantics = [#tpu.dimension_semantics<parallel>], iteration_bounds = array<i64: 1>, scalar_prefetch = 0 : i64, scratch_operands = 0 : i64, tpu.core_type = #tpu.core_type<tc>, window_params = [{transform_indices = @transform_0, window_bounds = array<i64: 8, 256>}, {transform_indices = @transform_1, window_bounds = array<i64: 8, 256>}, {transform_indices = @transform_2, window_bounds = array<i64: 8, 256>}]} {
    %c0 = arith.constant 0 : index
    %c0_0 = arith.constant 0 : index
    %0 = vector.load %arg1[%c0, %c0_0] : memref<8x256xf32, #tpu.memory_space<vmem>>, vector<8x256xf32>
    %cst = arith.constant dense<0.000000e+00> : vector<8xf32>
    %1 = vector.multi_reduction <add>, %0, %cst [1] : vector<8x256xf32> to vector<8xf32>
    %2 = vector.shape_cast %1 : vector<8xf32> to vector<8x1xf32>
    %cst_1 = arith.constant 2.560000e+02 : f32
    %3 = vector.broadcast %cst_1 : f32 to vector<8x1xf32>
    %4 = arith.divf %2, %3 : vector<8x1xf32>
    %5 = vector.broadcast %4 : vector<8x1xf32> to vector<8x256xf32>
    %6 = arith.subf %0, %5 : vector<8x256xf32>
    %7 = arith.mulf %6, %6 : vector<8x256xf32>
    %cst_2 = arith.constant dense<0.000000e+00> : vector<8xf32>
    %8 = vector.multi_reduction <add>, %7, %cst_2 [1] : vector<8x256xf32> to vector<8xf32>
    %9 = vector.shape_cast %8 : vector<8xf32> to vector<8x1xf32>
    %cst_3 = arith.constant 2.560000e+02 : f32
    %10 = vector.broadcast %cst_3 : f32 to vector<8x1xf32>
    %11 = arith.divf %9, %10 : vector<8x1xf32>
    %c0_4 = arith.constant 0 : index
    %c0_5 = arith.constant 0 : index
    %12 = vector.load %arg2[%c0_4, %c0_5] : memref<8x256xf32, #tpu.memory_space<vmem>>, vector<8x256xf32>
    %cst_6 = arith.constant dense<0.000000e+00> : vector<8xf32>
    %13 = vector.multi_reduction <add>, %12, %cst_6 [1] : vector<8x256xf32> to vector<8xf32>
    %14 = vector.shape_cast %13 : vector<8xf32> to vector<8x1xf32>
    %15 = arith.mulf %12, %12 : vector<8x256xf32>
    %cst_7 = arith.constant dense<0.000000e+00> : vector<8xf32>
    %16 = vector.multi_reduction <add>, %15, %cst_7 [1] : vector<8x256xf32> to vector<8xf32>
    %17 = vector.shape_cast %16 : vector<8xf32> to vector<8x1xf32>
    %cst_8 = arith.constant 3.906250e-03 : f32
    %18 = vector.broadcast %cst_8 : f32 to vector<8x1xf32>
    %19 = arith.mulf %14, %18 : vector<8x1xf32>
    %20 = arith.mulf %14, %19 : vector<8x1xf32>
    %21 = arith.subf %17, %20 : vector<8x1xf32>
    %cst_9 = arith.constant 0.000000e+00 : f32
    %22 = vector.broadcast %cst_9 : f32 to vector<8x1xf32>
    %23 = arith.maximumf %21, %22 : vector<8x1xf32>
    %cst_10 = arith.constant 2.550000e+02 : f32
    %24 = vector.broadcast %cst_10 : f32 to vector<8x1xf32>
    %25 = arith.divf %23, %24 : vector<8x1xf32>
    %cst_11 = arith.constant 9.99999974E-6 : f32
    %26 = vector.broadcast %cst_11 : f32 to vector<8x1xf32>
    %27 = arith.addf %25, %26 : vector<8x1xf32>
    %28 = math.sqrt %27 : vector<8x1xf32>
    %cst_12 = arith.constant 9.99999974E-6 : f32
    %29 = vector.broadcast %cst_12 : f32 to vector<8x1xf32>
    %30 = arith.addf %11, %29 : vector<8x1xf32>
    %31 = math.rsqrt %30 : vector<8x1xf32>
    %32 = arith.mulf %28, %31 : vector<8x1xf32>
    %33 = arith.mulf %4, %32 : vector<8x1xf32>
    %34 = arith.subf %19, %33 : vector<8x1xf32>
    %35 = vector.broadcast %32 : vector<8x1xf32> to vector<8x256xf32>
    %36 = arith.mulf %0, %35 : vector<8x256xf32>
    %37 = vector.broadcast %34 : vector<8x1xf32> to vector<8x256xf32>
    %38 = arith.addf %36, %37 : vector<8x256xf32>
    %c0_13 = arith.constant 0 : index
    %c0_14 = arith.constant 0 : index
    %39 = vector.load %arg3[%c0_13, %c0_14] : memref<8x256xf32, #tpu.memory_space<vmem>>, vector<8x256xf32>
    tpu.vector_store %arg3[%c0_13, %c0_14], %38 {strides = array<i32>} : memref<8x256xf32, #tpu.memory_space<vmem>>, vector<8x256xf32>,
    return
  }
  func.func @transform_0(%arg0: i32) -> (i32, i32) {
    %c0_i32 = arith.constant 0 : i32
    %c0_i32_0 = arith.constant 0 : i32
    return %arg0, %c0_i32 : i32, i32
  }
  func.func @transform_1(%arg0: i32) -> (i32, i32) {
    %c0_i32 = arith.constant 0 : i32
    %c0_i32_0 = arith.constant 0 : i32
    return %arg0, %c0_i32 : i32, i32
  }
  func.func @transform_2(%arg0: i32) -> (i32, i32) {
    %c0_i32 = arith.constant 0 : i32
    %c0_i32_0 = arith.constant 0 : i32
    return %arg0, %c0_i32 : i32, i32
  }
}

</mosaic_0001>

<llo_original>
// kernel: tpu_custom_call.1
$region0: #{tpu_custom_call.1}
  #allocation0 [shape = 'u32[]', space=smem, size = 0x4, offset = 0x4, fixed_abs, tag = 'smem constant byte address 0x4 - core index']
  #allocation1 [shape = 'u32[144,128]{1,0:T(1,128)}', space=vmem, size = 0x12000, scoped, tag = 'internal scratch']
  %s0 = inlined_call_operand.hbm [shape: f32[8,256], index: 0, kind: input, shape index: {}]
  %s1 = inlined_call_operand.hbm [shape: f32[8,256], index: 1, kind: input, shape index: {}]
  %s2 = inlined_call_operand.hbm [shape: f32[8,256], index: 2, kind: output, shape index: {}]
  %s3 = sld [smem:[#allocation0]]
  $region26: #{tpu_custom_call.1} parent=0
    _
  %s5 = ssub.s32 1, %s3
  %s6 = scalar_select 0, %s5, %s3
  $region1: #{tpu_custom_call.1} parent=0
    #allocation2 [shape = 'u8[8192]{0}', space=vmem, size = 0x2000, scoped, tag = 'input window, operand 0, single buffered']
    #allocation3 [shape = 's32[1]{0}', space=sflag, size = 0x4, scoped, tag = 'scoped memory for tpu_custom_call.1']
    #allocation4 [shape = 's32[1]{0}', space=sflag, size = 0x4, scoped, tag = 'scoped memory for tpu_custom_call.1']
    #allocation5 [shape = 'u8[8192]{0}', space=vmem, size = 0x2000, scoped, tag = 'input window, operand 1, single buffered']
    #allocation6 [shape = 's32[1]{0}', space=sflag, size = 0x4, scoped, tag = 'scoped memory for tpu_custom_call.1']
    #allocation7 [shape = 'u8[8192]{0}', space=vmem, size = 0x2000, scoped, tag = 'output window, operand 0, single buffered']
    %7 = vsyncpa [#allocation3], 0
    %8 = vsyncpa [#allocation6], 0
    %9 = vsyncpa [#allocation4], 0
    // Predicated region
    $region2: #{tpu_custom_call.1} parent=1 // pred_check
      _
    $region3: #{tpu_custom_call.1} parent=1 // pred_check_branch
      %11 = sbr.rel (0) target = $region5
    $region4: #{tpu_custom_call.1} parent=1 // pred_region
      %s13 = ssub.s32 256, 256
      %14 = vsyncadd [#allocation3], %s13
      %s16 = sshll.u32 [#allocation2], 4
      %s17 = int_to_ptr.vmem [resolvable:$true] %s16
      %19 = dma.hbm_to_vmem [thread:$0]  %s0, 256, %s17, [#allocation3]
    $region5: #{tpu_custom_call.1} parent=1 // pred_fallthru
      _
    // Predicated region
    $region6: #{tpu_custom_call.1} parent=1 // pred_check
      _
    $region7: #{tpu_custom_call.1} parent=1 // pred_check_branch
      %21 = sbr.rel (0) target = $region9
    $region8: #{tpu_custom_call.1} parent=1 // pred_region
      %s23 = ssub.s32 256, 256
      %24 = vsyncadd [#allocation6], %s23
      %s26 = sshll.u32 [#allocation5], 4
      %s27 = int_to_ptr.vmem [resolvable:$true] %s26
      %29 = dma.hbm_to_vmem [thread:$0]  %s1, 256, %s27, [#allocation6]
    $region9: #{tpu_custom_call.1} parent=1 // pred_fallthru
      _
    // Predicated region
    $region10: #{tpu_custom_call.1} parent=1 // pred_check
      _
    $region11: #{tpu_custom_call.1} parent=1 // pred_check_branch
      %31 = sbr.rel (0) target = $region13
    $region12: #{tpu_custom_call.1} parent=1 // pred_region
      %32 = dma.done [#allocation3], 256
    $region13: #{tpu_custom_call.1} parent=1 // pred_fallthru
      _
    // Predicated region
    $region14: #{tpu_custom_call.1} parent=1 // pred_check
      _
    $region15: #{tpu_custom_call.1} parent=1 // pred_check_branch
      %34 = sbr.rel (0) target = $region17
    $region16: #{tpu_custom_call.1} parent=1 // pred_region
      %35 = dma.done [#allocation6], 256
    $region17: #{tpu_custom_call.1} parent=1 // pred_fallthru
      _
    %v36 = vld [vmem:[#allocation2] sm:$0xff]
    %v37 = vld [vmem:[#allocation2 + $0x8] sm:$0xff]
    %v38 = vadd.f32 %v36, %v37
    %39 = vadd.xlane.f32.xlu0 %v38
    %v40 = vpop.xlane.xlu0 %39
    %v41 = vrcp.pop 256.0
    %v42 = vmul.f32 %v40, %v41
    %v43 = vsub.f32 %v36, %v42
    %v44 = vsub.f32 %v37, %v42
    %v45 = vmul.f32 %v43, %v43
    %v46 = vmul.f32 %v44, %v44
    %v47 = vadd.f32 %v45, %v46
    %48 = vadd.xlane.f32.xlu0 %v47
    %v49 = vpop.xlane.xlu0 %48
    %v50 = vmul.f32 %v49, %v41
    %v51 = vld [vmem:[#allocation5] sm:$0xff]
    %v52 = vld [vmem:[#allocation5 + $0x8] sm:$0xff]
    %v53 = vadd.f32 %v51, %v52
    %54 = vadd.xlane.f32.xlu0 %v53
    %v55 = vpop.xlane.xlu0 %54
    %v56 = vmul.f32 %v51, %v51
    %v57 = vmul.f32 %v52, %v52
    %v58 = vadd.f32 %v56, %v57
    %59 = vadd.xlane.f32.xlu0 %v58
    %v60 = vpop.xlane.xlu0 %59
    %v61 = vmul.f32 %v55, 0.00390625
    %v62 = vmul.f32 %v55, %v61
    %v63 = vsub.f32 %v60, %v62
    %v64 = vmax.f32 %v63, 0.0
    %v65 = vrcp.pop 255.0
    %v66 = vmul.f32 %v64, %v65
    %v67 = vadd.f32 %v66, 1e-05
    %v68 = vrsqrt.pop %v67
    %v69 = vmul.f32 %v67, %v68
    %vm70 = vcmp.eq.f32.partialorder %v67, inf
    %v71 = vsel %vm70, %v67, %v69
    %vm72 = vcmp.eq.f32.partialorder %v67, 0.0
    %v73 = vand.u32 %v67, 2147483648
    %v74 = vsel %vm72, %v73, %v71
    %v75 = vadd.f32 %v50, 1e-05
    %v76 = vrsqrt.pop %v75
    %v77 = vmul.f32 %v74, %v76
    %v78 = vmul.f32 %v42, %v77
    %v79 = vsub.f32 %v61, %v78
    %v80 = vmul.f32 %v36, %v77
    %v81 = vmul.f32 %v37, %v77
    %v82 = vadd.f32 %v80, %v79
    %v83 = vadd.f32 %v81, %v79
    %84 = vst [vmem:[#allocation7] sm:$0xff] %v82
    %85 = vst [vmem:[#allocation7 + $0x8] sm:$0xff] %v83
    // Predicated region
    $region18: #{tpu_custom_call.1} parent=1 // pred_check
      _
    $region19: #{tpu_custom_call.1} parent=1 // pred_check_branch
      %87 = sbr.rel (0) target = $region21
    $region20: #{tpu_custom_call.1} parent=1 // pred_region
      %s89 = ssub.s32 256, 256
      %90 = vsyncadd [#allocation4], %s89
      %s92 = sshll.u32 [#allocation7], 4
      %s93 = int_to_ptr.vmem [resolvable:$true] %s92
      %95 = dma.vmem_to_hbm [thread:$0]  %s93, 256, %s2, [#allocation4]
    $region21: #{tpu_custom_call.1} parent=1 // pred_fallthru
      _
    // Predicated region
    $region22: #{tpu_custom_call.1} parent=1 // pred_check
      _
    $region23: #{tpu_custom_call.1} parent=1 // pred_check_branch
      %97 = sbr.rel (0) target = $region25
    $region24: #{tpu_custom_call.1} parent=1 // pred_region
      %98 = dma.done [#allocation4], 256
    $region25: #{tpu_custom_call.1} parent=1 // pred_fallthru
      _
    %99 = vsyncpa [#allocation3], 1
    %100 = vsyncpa [#allocation6], 1
    %101 = vsyncpa [#allocation4], 1

</llo_original>
